<compile_context>
chip_gen: v6e
topology: v6e:2x2x1
jax: 0.10.0
libtpu: 0.0.40
codegen_flags: <defaults>
</compile_context>

<pallas_src>
import functools

import jax
import jax.numpy as jnp
from jax.experimental import pallas as pl
from jax.experimental.pallas import tpu as pltpu

FILTER_ORDER = 6
NUM_COEFFS = FILTER_ORDER + 1  # 7 polynomial coefficients


def _spectral_filter_kernel(coeffs_ref, eig_ref, out_ref, *, num_coeffs):
    """Elementwise polynomial filter + sigmoid on one [tm, W] tile.

    coeffs_ref : SMEM, shape (num_coeffs,) float32
    eig_ref    : VMEM, shape (tm, W)
    out_ref    : VMEM, shape (tm, W)
    """
    eig = eig_ref[...].astype(jnp.float32)

    # result = c0 (broadcast) — same value as c0 * ones_like(eig) but without
    # materializing a ones vreg / extra vmul.
    result = jnp.full_like(eig, coeffs_ref[0])

    # Same accumulation order as the PyTorch loop (power-series, not Horner),
    # so floating-point semantics match exactly.
    eigen_power = eig
    for i in range(1, num_coeffs):
        result = result + coeffs_ref[i] * eigen_power
        if i < num_coeffs - 1:
            eigen_power = eigen_power * eig

    out_ref[...] = (jax.nn.sigmoid(result) + 1e-6).astype(out_ref.dtype)


def _round_up(x: int, m: int) -> int:
    return ((x + m - 1) // m) * m


def simple_spectral_filter(eigenvalues: jax.Array, coeffs: jax.Array,
                           *, lane_width: int = 512,
                           target_block_bytes: int = 2 * 1024 * 1024
                           ) -> jax.Array:
    """Apply the learnable spectral filter elementwise to `eigenvalues`.

    Accepts any input shape/size; returns the same shape and dtype.
    """
    orig_shape = eigenvalues.shape
    orig_dtype = eigenvalues.dtype
    total = int(eigenvalues.size)

    # ---- choose a lane-dense 2-D view [rows, W], W multiple of 128 ----------
    W = lane_width if total >= lane_width else 128
    W = max(128, (W // 128) * 128)

    # ---- choose row tile: ~target_block_bytes per block, multiple of 8 ------
    elem_bytes = 4  # compute/store path is f32-sized blocks (input is f32 here)
    tm_cap = max(8, (target_block_bytes // (W * elem_bytes) // 8) * 8)
    rows_needed = pl.cdiv(total, W)
    tm = min(tm_cap, _round_up(rows_needed, 8))

    # ---- pad flat data to a whole number of (tm x W) blocks -----------------
    block_elems = tm * W
    padded_total = _round_up(max(total, 1), block_elems)
    flat = eigenvalues.reshape(-1)
    if padded_total != total:
        flat = jnp.pad(flat, (0, padded_total - total))
    eig2d = flat.reshape(padded_total // W, W)
    rows = eig2d.shape[0]
    grid = (rows // tm,)

    kernel = functools.partial(_spectral_filter_kernel,
                               num_coeffs=int(coeffs.shape[0]))

    # VMEM budget: double-buffered input + output blocks, plus headroom.
    block_bytes = tm * W * elem_bytes
    vmem_limit = min(64 * 1024 * 1024,
                     max(16 * 1024 * 1024, 4 * block_bytes + (2 << 20)))

    ncoef = int(coeffs.shape[0])
    cost = pl.CostEstimate(
        flops=(2 * ncoef) * padded_total,        # ~11 mul + 6 add per element
        transcendentals=padded_total,            # one sigmoid per element
        bytes_accessed=2 * padded_total * elem_bytes,
    )

    out2d = pl.pallas_call(
        kernel,
        out_shape=jax.ShapeDtypeStruct((rows, W), orig_dtype),
        grid=grid,
        in_specs=[
            # coefficients: tiny 1-D vector, keep in SMEM (scalar-indexed reads)
            pl.BlockSpec(memory_space=pltpu.MemorySpace.SMEM),
            # eigenvalues: large lane-dense row tiles
            pl.BlockSpec((tm, W), lambda i: (i, 0)),
        ],
        out_specs=pl.BlockSpec((tm, W), lambda i: (i, 0)),
        compiler_params=pltpu.CompilerParams(
            dimension_semantics=("parallel",),
            vmem_limit_bytes=int(vmem_limit)),
        cost_estimate=cost,
    )(coeffs.astype(jnp.float32), eig2d)

    return out2d.reshape(-1)[:total].reshape(orig_shape)


def reference_filter(eigenvalues, coeffs):
    """Pure-JAX reference mirroring the PyTorch forward."""
    result = coeffs[0] * jnp.ones_like(eigenvalues)
    eigen_power = eigenvalues
    for i in range(1, coeffs.shape[0]):
        result = result + coeffs[i] * eigen_power
        if i < coeffs.shape[0] - 1:
            eigen_power = eigen_power * eigenvalues
    return jax.nn.sigmoid(result) + 1e-6


if __name__ == "__main__":
    # Deterministic parameter init: 'smooth' pattern from the module __init__.
    smooth = [1.0, -0.5, 0.1, -0.02, 0.004, -0.0008, 0.00015]
    coeffs = jnp.zeros((NUM_COEFFS,), dtype=jnp.float32)
    coeffs = coeffs.at[:len(smooth[:NUM_COEFFS])].set(
        jnp.asarray(smooth[:NUM_COEFFS], dtype=jnp.float32))

    key = jax.random.PRNGKey(0)
    k1, k2 = jax.random.split(key)

    # Small deterministic eigenvalue inputs (e.g. a batch of spectra).
    eig_a = jax.random.uniform(k1, (8, 128), dtype=jnp.float32,
                               minval=0.0, maxval=2.0)
    # Odd shape to exercise the pad/flatten path (not a tile multiple).
    eig_b = jax.random.uniform(k2, (3, 50), dtype=jnp.float32,
                               minval=0.0, maxval=2.0)

    out_a = jax.block_until_ready(simple_spectral_filter(eig_a, coeffs))
    out_b = jax.block_until_ready(simple_spectral_filter(eig_b, coeffs))

    ref_a = reference_filter(eig_a, coeffs)
    ref_b = reference_filter(eig_b, coeffs)

    assert out_a.shape == eig_a.shape and out_b.shape == eig_b.shape
    assert jnp.allclose(out_a, ref_a, atol=1e-5, rtol=1e-5), "mismatch (a)"
    assert jnp.allclose(out_b, ref_b, atol=1e-5, rtol=1e-5), "mismatch (b)"

    print("KERNEL_OK")
</pallas_src>

<mosaic_0001>
module attributes {stable_mosaic.version = 11 : i64} {
  func.func @_spectral_filter_kernel(%arg0: i32, %arg1: memref<7xf32, #tpu.memory_space<smem>>, %arg2: memref<8x512xf32, #tpu.memory_space<vmem>>, %arg3: memref<8x512xf32, #tpu.memory_space<vmem>>) attributes {dimension_semantics = [#tpu.dimension_semantics<parallel>], iteration_bounds = array<i64: 1>, scalar_prefetch = 0 : i64, scratch_operands = 0 : i64, tpu.core_type = #tpu.core_type<tc>, window_params = [{transform_indices = @transform_0, window_bounds = array<i64: 7>}, {transform_indices = @transform_1, window_bounds = array<i64: 8, 512>}, {transform_indices = @transform_2, window_bounds = array<i64: 8, 512>}]} {
    %c0 = arith.constant 0 : index
    %c0_0 = arith.constant 0 : index
    %0 = vector.load %arg2[%c0, %c0_0] : memref<8x512xf32, #tpu.memory_space<vmem>>, vector<8x512xf32>
    %c0_1 = arith.constant 0 : index
    %1 = memref.load %arg1[%c0_1] : memref<7xf32, #tpu.memory_space<smem>>
    %2 = vector.broadcast %1 : f32 to vector<8x512xf32>
    %c1 = arith.constant 1 : index
    %3 = memref.load %arg1[%c1] : memref<7xf32, #tpu.memory_space<smem>>
    %4 = vector.broadcast %3 : f32 to vector<8x512xf32>
    %5 = arith.mulf %4, %0 : vector<8x512xf32>
    %6 = arith.addf %2, %5 : vector<8x512xf32>
    %7 = arith.mulf %0, %0 : vector<8x512xf32>
    %c2 = arith.constant 2 : index
    %8 = memref.load %arg1[%c2] : memref<7xf32, #tpu.memory_space<smem>>
    %9 = vector.broadcast %8 : f32 to vector<8x512xf32>
    %10 = arith.mulf %9, %7 : vector<8x512xf32>
    %11 = arith.addf %6, %10 : vector<8x512xf32>
    %12 = arith.mulf %7, %0 : vector<8x512xf32>
    %c3 = arith.constant 3 : index
    %13 = memref.load %arg1[%c3] : memref<7xf32, #tpu.memory_space<smem>>
    %14 = vector.broadcast %13 : f32 to vector<8x512xf32>
    %15 = arith.mulf %14, %12 : vector<8x512xf32>
    %16 = arith.addf %11, %15 : vector<8x512xf32>
    %17 = arith.mulf %12, %0 : vector<8x512xf32>
    %c4 = arith.constant 4 : index
    %18 = memref.load %arg1[%c4] : memref<7xf32, #tpu.memory_space<smem>>
    %19 = vector.broadcast %18 : f32 to vector<8x512xf32>
    %20 = arith.mulf %19, %17 : vector<8x512xf32>
    %21 = arith.addf %16, %20 : vector<8x512xf32>
    %22 = arith.mulf %17, %0 : vector<8x512xf32>
    %c5 = arith.constant 5 : index
    %23 = memref.load %arg1[%c5] : memref<7xf32, #tpu.memory_space<smem>>
    %24 = vector.broadcast %23 : f32 to vector<8x512xf32>
    %25 = arith.mulf %24, %22 : vector<8x512xf32>
    %26 = arith.addf %21, %25 : vector<8x512xf32>
    %27 = arith.mulf %22, %0 : vector<8x512xf32>
    %c6 = arith.constant 6 : index
    %28 = memref.load %arg1[%c6] : memref<7xf32, #tpu.memory_space<smem>>
    %29 = vector.broadcast %28 : f32 to vector<8x512xf32>
    %30 = arith.mulf %29, %27 : vector<8x512xf32>
    %31 = arith.addf %26, %30 : vector<8x512xf32>
    %32 = arith.negf %31 : vector<8x512xf32>
    %33 = math.exp %32 : vector<8x512xf32>
    %cst = arith.constant 1.000000e+00 : f32
    %34 = vector.broadcast %cst : f32 to vector<8x512xf32>
    %35 = arith.addf %34, %33 : vector<8x512xf32>
    %36 = arith.divf %34, %35 : vector<8x512xf32>
    %cst_2 = arith.constant 9.99999997E-7 : f32
    %37 = vector.broadcast %cst_2 : f32 to vector<8x512xf32>
    %38 = arith.addf %36, %37 : vector<8x512xf32>
    %c0_3 = arith.constant 0 : index
    %c0_4 = arith.constant 0 : index
    %39 = vector.load %arg3[%c0_3, %c0_4] : memref<8x512xf32, #tpu.memory_space<vmem>>, vector<8x512xf32>
    tpu.vector_store %arg3[%c0_3, %c0_4], %38 {strides = array<i32>} : memref<8x512xf32, #tpu.memory_space<vmem>>, vector<8x512xf32>,
    return
  }
  func.func @transform_0(%arg0: i32) -> i32 {
    %c0_i32 = arith.constant 0 : i32
    %c0_i32_0 = arith.constant 0 : i32
    return %c0_i32 : i32
  }
  func.func @transform_1(%arg0: i32) -> (i32, i32) {
    %c0_i32 = arith.constant 0 : i32
    %c0_i32_0 = arith.constant 0 : i32
    return %arg0, %c0_i32 : i32, i32
  }
  func.func @transform_2(%arg0: i32) -> (i32, i32) {
    %c0_i32 = arith.constant 0 : i32
    %c0_i32_0 = arith.constant 0 : i32
    return %arg0, %c0_i32 : i32, i32
  }
}

</mosaic_0001>

<llo_original>
// kernel: tpu_custom_call.1
$region0: #{tpu_custom_call.1}
  #allocation0 [shape = 'u32[]', space=smem, size = 0x4, offset = 0x4, fixed_abs, tag = 'smem constant byte address 0x4 - core index']
  #allocation1 [shape = 'u32[144,128]{1,0:T(1,128)}', space=vmem, size = 0x12000, scoped, tag = 'internal scratch']
  %s0 = inlined_call_operand.hbm [shape: f32[7], index: 0, kind: input, shape index: {}]
  %s1 = inlined_call_operand.hbm [shape: f32[8,512], index: 1, kind: input, shape index: {}]
  %s2 = inlined_call_operand.hbm [shape: f32[8,512], index: 2, kind: output, shape index: {}]
  %s3 = sld [smem:[#allocation0]]
  $region26: #{tpu_custom_call.1} parent=0
    _
  %s5 = ssub.s32 1, %s3
  %s6 = scalar_select 0, %s5, %s3
  $region1: #{tpu_custom_call.1} parent=0
    #allocation2 [shape = 'u8[512]{0}', space=smem, size = 0x200, scoped, tag = 'input window, operand 0, single buffered']
    #allocation3 [shape = 's32[1]{0}', space=sflag, size = 0x4, scoped, tag = 'scoped memory for tpu_custom_call.1']
    #allocation4 [shape = 's32[1]{0}', space=sflag, size = 0x4, scoped, tag = 'scoped memory for tpu_custom_call.1']
    #allocation5 [shape = 's32[1]{0}', space=sflag, size = 0x4, scoped, tag = 'scoped memory for tpu_custom_call.1']
    #allocation6 [shape = 'u8[16384]{0}', space=vmem, size = 0x4000, scoped, tag = 'input window, operand 1, single buffered']
    #allocation7 [shape = 'u8[16384]{0}', space=vmem, size = 0x4000, scoped, tag = 'output window, operand 0, single buffered']
    %7 = vsyncpa [#allocation5], 0
    %8 = vsyncpa [#allocation3], 0
    %9 = vsyncpa [#allocation4], 0
    // Predicated region
    $region2: #{tpu_custom_call.1} parent=1 // pred_check
      _
    $region3: #{tpu_custom_call.1} parent=1 // pred_check_branch
      %11 = sbr.rel (0) target = $region5
    $region4: #{tpu_custom_call.1} parent=1 // pred_region
      %s13 = ssub.s32 16, 16
      %14 = vsyncadd [#allocation5], %s13
      %17 = dma.hbm_to_smem %s0, 16, [#allocation2], [#allocation5]
    $region5: #{tpu_custom_call.1} parent=1 // pred_fallthru
      _
    // Predicated region
    $region6: #{tpu_custom_call.1} parent=1 // pred_check
      _
    $region7: #{tpu_custom_call.1} parent=1 // pred_check_branch
      %19 = sbr.rel (0) target = $region9
    $region8: #{tpu_custom_call.1} parent=1 // pred_region
      %s21 = ssub.s32 512, 512
      %22 = vsyncadd [#allocation3], %s21
      %s24 = sshll.u32 [#allocation6], 4
      %s25 = int_to_ptr.vmem [resolvable:$true] %s24
      %27 = dma.hbm_to_vmem [thread:$0]  %s1, 512, %s25, [#allocation3]
    $region9: #{tpu_custom_call.1} parent=1 // pred_fallthru
      _
    // Predicated region
    $region10: #{tpu_custom_call.1} parent=1 // pred_check
      _
    $region11: #{tpu_custom_call.1} parent=1 // pred_check_branch
      %29 = sbr.rel (0) target = $region13
    $region12: #{tpu_custom_call.1} parent=1 // pred_region
      %30 = dma.done [#allocation5], 16
    $region13: #{tpu_custom_call.1} parent=1 // pred_fallthru
      _
    // Predicated region
    $region14: #{tpu_custom_call.1} parent=1 // pred_check
      _
    $region15: #{tpu_custom_call.1} parent=1 // pred_check_branch
      %32 = sbr.rel (0) target = $region17
    $region16: #{tpu_custom_call.1} parent=1 // pred_region
      %33 = dma.done [#allocation3], 512
    $region17: #{tpu_custom_call.1} parent=1 // pred_fallthru
      _
    %34 = sfence
    %v35 = vld [vmem:[#allocation6] sm:$0xff]
    %v36 = vld [vmem:[#allocation6 + $0x8] sm:$0xff]
    %v37 = vld [vmem:[#allocation6 + $0x10] sm:$0xff]
    %v38 = vld [vmem:[#allocation6 + $0x18] sm:$0xff]
    %s39 = sld [smem:[#allocation2]]
    %v40 = vstv %s39
    %s41 = sld [smem:[#allocation2 + $0x1]]
    %v42 = vstv %s41
    %v43 = vmul.f32 %v42, %v35
    %v44 = vmul.f32 %v42, %v36
    %v45 = vmul.f32 %v42, %v37
    %v46 = vmul.f32 %v42, %v38
    %v47 = vadd.f32 %v40, %v43
    %v48 = vadd.f32 %v40, %v44
    %v49 = vadd.f32 %v40, %v45
    %v50 = vadd.f32 %v40, %v46
    %v51 = vmul.f32 %v35, %v35
    %v52 = vmul.f32 %v36, %v36
    %v53 = vmul.f32 %v37, %v37
    %v54 = vmul.f32 %v38, %v38
    %s55 = sld [smem:[#allocation2 + $0x2]]
    %v56 = vstv %s55
    %v57 = vmul.f32 %v56, %v51
    %v58 = vmul.f32 %v56, %v52
    %v59 = vmul.f32 %v56, %v53
    %v60 = vmul.f32 %v56, %v54
    %v61 = vadd.f32 %v47, %v57
    %v62 = vadd.f32 %v48, %v58
    %v63 = vadd.f32 %v49, %v59
    %v64 = vadd.f32 %v50, %v60
    %v65 = vmul.f32 %v51, %v35
    %v66 = vmul.f32 %v52, %v36
    %v67 = vmul.f32 %v53, %v37
    %v68 = vmul.f32 %v54, %v38
    %s69 = sld [smem:[#allocation2 + $0x3]]
    %v70 = vstv %s69
    %v71 = vmul.f32 %v70, %v65
    %v72 = vmul.f32 %v70, %v66
    %v73 = vmul.f32 %v70, %v67
    %v74 = vmul.f32 %v70, %v68
    %v75 = vadd.f32 %v61, %v71
    %v76 = vadd.f32 %v62, %v72
    %v77 = vadd.f32 %v63, %v73
    %v78 = vadd.f32 %v64, %v74
    %v79 = vmul.f32 %v65, %v35
    %v80 = vmul.f32 %v66, %v36
    %v81 = vmul.f32 %v67, %v37
    %v82 = vmul.f32 %v68, %v38
    %s83 = sld [smem:[#allocation2 + $0x4]]
    %v84 = vstv %s83
    %v85 = vmul.f32 %v84, %v79
    %v86 = vmul.f32 %v84, %v80
    %v87 = vmul.f32 %v84, %v81
    %v88 = vmul.f32 %v84, %v82
    %v89 = vadd.f32 %v75, %v85
    %v90 = vadd.f32 %v76, %v86
    %v91 = vadd.f32 %v77, %v87
    %v92 = vadd.f32 %v78, %v88
    %v93 = vmul.f32 %v79, %v35
    %v94 = vmul.f32 %v80, %v36
    %v95 = vmul.f32 %v81, %v37
    %v96 = vmul.f32 %v82, %v38
    %s97 = sld [smem:[#allocation2 + $0x5]]
    %v98 = vstv %s97
    %v99 = vmul.f32 %v98, %v93
    %v100 = vmul.f32 %v98, %v94
    %v101 = vmul.f32 %v98, %v95
    %v102 = vmul.f32 %v98, %v96
    %v103 = vadd.f32 %v89, %v99
    %v104 = vadd.f32 %v90, %v100
    %v105 = vadd.f32 %v91, %v101
    %v106 = vadd.f32 %v92, %v102
    %v107 = vmul.f32 %v93, %v35
    %v108 = vmul.f32 %v94, %v36
    %v109 = vmul.f32 %v95, %v37
    %v110 = vmul.f32 %v96, %v38
    %s111 = sld [smem:[#allocation2 + $0x6]]
    %v112 = vstv %s111
    %v113 = vmul.f32 %v112, %v107
    %v114 = vmul.f32 %v112, %v108
    %v115 = vmul.f32 %v112, %v109
    %v116 = vmul.f32 %v112, %v110
    %v117 = vadd.f32 %v103, %v113
    %v118 = vadd.f32 %v104, %v114
    %v119 = vadd.f32 %v105, %v115
    %v120 = vadd.f32 %v106, %v116
    %v121 = vxor.u32 %v117, 2147483648
    %v122 = vxor.u32 %v118, 2147483648
    %v123 = vxor.u32 %v119, 2147483648
    %v124 = vxor.u32 %v120, 2147483648
    %v125 = vmul.f32 %v121, 1.442695
    %v126 = vpow.pop %v125
    %v127 = vmul.f32 %v122, 1.442695
    %v128 = vpow.pop %v127
    %v129 = vmul.f32 %v123, 1.442695
    %v130 = vpow.pop %v129
    %v131 = vmul.f32 %v124, 1.442695
    %v132 = vpow.pop %v131
    %v133 = vadd.f32 %v126, 1.0
    %v134 = vadd.f32 %v128, 1.0
    %v135 = vadd.f32 %v130, 1.0
    %v136 = vadd.f32 %v132, 1.0
    %v137 = vrcp.pop %v133
    %v138 = vmul.f32 1.0, %v137
    %v139 = vrcp.pop %v134
    %v140 = vmul.f32 1.0, %v139
    %v141 = vrcp.pop %v135
    %v142 = vmul.f32 1.0, %v141
    %v143 = vrcp.pop %v136
    %v144 = vmul.f32 1.0, %v143
    %v145 = vadd.f32 %v138, 1e-06
    %v146 = vadd.f32 %v140, 1e-06
    %v147 = vadd.f32 %v142, 1e-06
    %v148 = vadd.f32 %v144, 1e-06
    %149 = vst [vmem:[#allocation7] sm:$0xff] %v145
    %150 = vst [vmem:[#allocation7 + $0x8] sm:$0xff] %v146
    %151 = vst [vmem:[#allocation7 + $0x10] sm:$0xff] %v147
    %152 = vst [vmem:[#allocation7 + $0x18] sm:$0xff] %v148
    // Predicated region
    $region18: #{tpu_custom_call.1} parent=1 // pred_check
      _
    $region19: #{tpu_custom_call.1} parent=1 // pred_check_branch
      %154 = sbr.rel (0) target = $region21
    $region20: #{tpu_custom_call.1} parent=1 // pred_region
      %s156 = ssub.s32 512, 512
      %157 = vsyncadd [#allocation4], %s156
      %s159 = sshll.u32 [#allocation7], 4
      %s160 = int_to_ptr.vmem [resolvable:$true] %s159
      %162 = dma.vmem_to_hbm [thread:$0]  %s160, 512, %s2, [#allocation4]
    $region21: #{tpu_custom_call.1} parent=1 // pred_fallthru
      _
    // Predicated region
    $region22: #{tpu_custom_call.1} parent=1 // pred_check
      _
    $region23: #{tpu_custom_call.1} parent=1 // pred_check_branch
      %164 = sbr.rel (0) target = $region25
    $region24: #{tpu_custom_call.1} parent=1 // pred_region
      %165 = dma.done [#allocation4], 512
    $region25: #{tpu_custom_call.1} parent=1 // pred_fallthru
      _
    %166 = vsyncpa [#allocation3], 1
    %167 = vsyncpa [#allocation4], 1
    %168 = vsyncpa [#allocation5], 1

</llo_original>
